<compile_context>
chip_gen: v7x
topology: tpu7x:2x2x1
jax: 0.10.0
libtpu: 0.0.40
codegen_flags: <defaults>
</compile_context>

<pallas_src>
import functools

import jax
import jax.numpy as jnp
from jax import lax
from jax.experimental import pallas as pl
from jax.experimental.pallas import tpu as pltpu


_LANE = 128


def _cdiv(a, b):
    return -(-a // b)


def _round_up(n, m):
    return _cdiv(n, m) * m


def _round_down(n, m):
    return (n // m) * m


def _pool_rows_kernel(x_ref, o_ref, *, inv_hw):
    # x_ref: (TR, L) — one contiguous slab of full rows; o_ref: (TR, 1).
    # f32 accumulation fused into the reduce; scale by 1/(H*W) once.
    o_ref[...] = (
        jnp.sum(x_ref[...], axis=-1, keepdims=True, dtype=jnp.float32) * inv_hw
    ).astype(o_ref.dtype)


def _pool_rows_ktiled_kernel(x_ref, o_ref, acc_ref, *, inv_hw, l_total, tk,
                             mask_tail):
    # Rare path for huge H*W. x_ref: (TR, TK); o_ref: (TR, 1);
    # acc_ref: (TR, 1) f32 running sum, resident across the last grid axis.
    k = pl.program_id(1)

    @pl.when(k == 0)
    def _():
        acc_ref[...] = jnp.zeros_like(acc_ref)

    x = x_ref[...]
    if mask_tail:
        # Tail K block is partial: zero the out-of-range lanes so undefined
        # pad-region values cannot contaminate valid rows' sums.
        col = lax.broadcasted_iota(jnp.int32, x.shape, dimension=1)
        x = jnp.where(col + k * tk < l_total, x, jnp.zeros_like(x))

    acc_ref[...] += jnp.sum(x, axis=-1, keepdims=True, dtype=jnp.float32)

    @pl.when(k == pl.num_programs(1) - 1)
    def _():
        o_ref[...] = (acc_ref[...] * inv_hw).astype(o_ref.dtype)


def global_pool_2d(x):
    """Global average pool: (B, C, H, W) -> (B, C), matching GlobalPool2d."""
    b, c, h, w = x.shape
    r, l = b * c, h * w
    inv_hw = 1.0 / float(l)

    # Small spatial extents (< one lane group): every vreg / DMA row would be
    # mostly masked padding; dispatch to plain XLA per the perf review.
    if l < _LANE:
        return jnp.mean(x.astype(jnp.float32), axis=(2, 3)).astype(x.dtype)

    x2 = x.reshape(r, l)  # free, NCHW-contiguous; spatial on the lane axis.

    itemsize = jnp.dtype(x.dtype).itemsize
    granule = max(8, 32 // max(itemsize, 1))   # sublane granule: 8/16/32

    # Generation-aware budgets (v7x has 64 MiB VMEM vs 128 MiB on v5e/v6e).
    try:
        vmem_cap = int(pltpu.get_tpu_info().vmem_capacity_bytes)
    except Exception:
        vmem_cap = 64 * 1024 * 1024            # conservative fallback
    block_bytes = max(1 << 22, vmem_cap // 8)  # 8 MiB (v7x) / 16 MiB (v5e/v6e)
    vmem_limit = int(min(vmem_cap // 2, 2 * block_bytes + (12 << 20)))

    l_lanes = _round_up(l, _LANE)              # lane-padded row width in VMEM
    # Per-row VMEM cost: input row + lane-padded (TR, 1) output row.
    row_bytes = (l_lanes + _LANE) * itemsize
    tr_budget = _round_down(block_bytes // row_bytes, granule)

    if tr_budget >= granule:
        # ---- Path A (common): full rows per block, 1-D parallel grid ------
        # Keep >= ~8 row blocks when the row count allows it so the purely
        # "parallel" grid shards across both TensorCores on v7x.
        tr_parallel = _round_up(max(1, _cdiv(r, 8)), granule)
        tr = max(granule, min(tr_budget, tr_parallel, _round_up(r, granule)))
        num_r = _cdiv(r, tr)                   # partial last block OK

        out = pl.pallas_call(
            functools.partial(_pool_rows_kernel, inv_hw=inv_hw),
            out_shape=jax.ShapeDtypeStruct((r, 1), x.dtype),
            grid_spec=pltpu.PrefetchScalarGridSpec(
                num_scalar_prefetch=0,
                grid=(num_r,),
                in_specs=[pl.BlockSpec((tr, l), lambda i: (i, 0))],
                out_specs=pl.BlockSpec((tr, 1), lambda i: (i, 0)),
            ),
            compiler_params=pltpu.CompilerParams(
                dimension_semantics=("parallel",),
                vmem_limit_bytes=vmem_limit,
            ),
        )(x2)
    else:
        # ---- Path B (rare: huge H*W): K-tiled reduction grid --------------
        tr = granule
        block_elems = block_bytes // itemsize
        tk = max(_LANE, _round_down(block_elems // tr, _LANE))
        tk = min(tk, l_lanes)
        num_r = _cdiv(r, tr)
        num_k = _cdiv(l, tk)
        mask_tail = (l % tk) != 0              # static; masking only if needed

        kernel = functools.partial(
            _pool_rows_ktiled_kernel,
            inv_hw=inv_hw, l_total=l, tk=tk, mask_tail=mask_tail)

        out = pl.pallas_call(
            kernel,
            out_shape=jax.ShapeDtypeStruct((r, 1), x.dtype),
            grid_spec=pltpu.PrefetchScalarGridSpec(
                num_scalar_prefetch=0,
                grid=(num_r, num_k),           # reduction axis last
                in_specs=[pl.BlockSpec((tr, tk), lambda i, k: (i, k))],
                out_specs=pl.BlockSpec((tr, 1), lambda i, k: (i, 0)),
                scratch_shapes=[pltpu.VMEM((tr, 1), jnp.float32)],
            ),
            compiler_params=pltpu.CompilerParams(
                dimension_semantics=("parallel", "arbitrary"),
                vmem_limit_bytes=vmem_limit,
            ),
        )(x2)

    return out.reshape(b, c)


if __name__ == "__main__":
    key = jax.random.PRNGKey(0)
    # Small NCHW input: batch=2, channels=4, spatial=16x16 (square, as the
    # PyTorch module implicitly requires).
    x = jax.random.normal(key, (2, 4, 16, 16), dtype=jnp.float32)

    out = global_pool_2d(x)
    out = jax.block_until_ready(out)

    # Sanity check against plain JAX reference.
    ref = jnp.mean(x, axis=(2, 3))
    assert out.shape == (2, 4)
    assert jnp.allclose(out, ref, atol=1e-5, rtol=1e-5)

    print("KERNEL_OK")
</pallas_src>

<mosaic_0001>
module attributes {stable_mosaic.version = 11 : i64} {
  func.func @_pool_rows_kernel(%arg0: i32, %arg1: memref<8x256xf32, #tpu.memory_space<vmem>>, %arg2: memref<8x1xf32, #tpu.memory_space<vmem>>) attributes {dimension_semantics = [#tpu.dimension_semantics<parallel>], iteration_bounds = array<i64: 1>, scalar_prefetch = 0 : i64, scratch_operands = 0 : i64, tpu.core_type = #tpu.core_type<tc>, window_params = [{transform_indices = @transform_0, window_bounds = array<i64: 8, 256>}, {transform_indices = @transform_1, window_bounds = array<i64: 8, 1>}]} {
    %c0 = arith.constant 0 : index
    %c0_0 = arith.constant 0 : index
    %0 = vector.load %arg1[%c0, %c0_0] : memref<8x256xf32, #tpu.memory_space<vmem>>, vector<8x256xf32>
    %cst = arith.constant dense<0.000000e+00> : vector<8xf32>
    %1 = vector.multi_reduction <add>, %0, %cst [1] : vector<8x256xf32> to vector<8xf32>
    %2 = vector.shape_cast %1 : vector<8xf32> to vector<8x1xf32>
    %cst_1 = arith.constant 3.906250e-03 : f32
    %3 = vector.broadcast %cst_1 : f32 to vector<8x1xf32>
    %4 = arith.mulf %2, %3 : vector<8x1xf32>
    %c0_2 = arith.constant 0 : index
    %c0_3 = arith.constant 0 : index
    %5 = vector.load %arg2[%c0_2, %c0_3] : memref<8x1xf32, #tpu.memory_space<vmem>>, vector<8x1xf32>
    tpu.vector_store %arg2[%c0_2, %c0_3], %4 {strides = array<i32>} : memref<8x1xf32, #tpu.memory_space<vmem>>, vector<8x1xf32>,
    return
  }
  func.func @transform_0(%arg0: i32) -> (i32, i32) {
    %c0_i32 = arith.constant 0 : i32
    %c0_i32_0 = arith.constant 0 : i32
    return %arg0, %c0_i32 : i32, i32
  }
  func.func @transform_1(%arg0: i32) -> (i32, i32) {
    %c0_i32 = arith.constant 0 : i32
    %c0_i32_0 = arith.constant 0 : i32
    return %arg0, %c0_i32 : i32, i32
  }
}

</mosaic_0001>

<llo_original>
// kernel: tpu_custom_call.1
$region0: #{tpu_custom_call.1}
  #allocation0 [shape = 'u32[]', space=smem, size = 0x4, offset = 0x4, fixed_abs, tag = 'smem constant byte address 0x4 - core index']
  #allocation1 [shape = 'u32[144,128]{1,0:T(1,128)}', space=vmem, size = 0x12000, scoped, tag = 'internal scratch']
  %s0 = inlined_call_operand.hbm [shape: f32[8,256], index: 0, kind: input, shape index: {}]
  %s1 = inlined_call_operand.vmem [shape: f32[8,1], index: 1, kind: output, shape index: {}]
  %s2 = sld [smem:[#allocation0]]
  $region18: #{tpu_custom_call.1} parent=0
    _
  %s4 = ssub.s32 1, %s2
  %s5 = scalar_select 0, %s4, %s2
  $region1: #{tpu_custom_call.1} parent=0
    #allocation2 [shape = 'u8[8192]{0}', space=vmem, size = 0x2000, scoped, tag = 'input window, operand 0, single buffered']
    #allocation3 [shape = 's32[1]{0}', space=sflag, size = 0x4, scoped, tag = 'scoped memory for tpu_custom_call.1']
    %6 = vsyncpa [#allocation3], 0
    // Predicated region
    $region2: #{tpu_custom_call.1} parent=1 // pred_check
      _
    $region3: #{tpu_custom_call.1} parent=1 // pred_check_branch
      %8 = sbr.rel (0) target = $region5
    $region4: #{tpu_custom_call.1} parent=1 // pred_region
      %s10 = ssub.s32 256, 256
      %11 = vsyncadd [#allocation3], %s10
      %s13 = sshll.u32 [#allocation2], 4
      %s14 = int_to_ptr.vmem [resolvable:$true] %s13
      %16 = dma.hbm_to_vmem [thread:$0]  %s0, 256, %s14, [#allocation3]
    $region5: #{tpu_custom_call.1} parent=1 // pred_fallthru
      _
    // Predicated region
    $region6: #{tpu_custom_call.1} parent=1 // pred_check
      _
    $region7: #{tpu_custom_call.1} parent=1 // pred_check_branch
      %18 = sbr.rel (0) target = $region9
    $region8: #{tpu_custom_call.1} parent=1 // pred_region
      %19 = dma.done [#allocation3], 256
    $region9: #{tpu_custom_call.1} parent=1 // pred_fallthru
      _
    %v20 = vld [vmem:[#allocation2] sm:$0xff]
    %v21 = vld [vmem:[#allocation2 + $0x8] sm:$0xff]
    %v22 = vadd.f32 %v20, %v21
    %23 = vadd.xlane.f32.xlu0 %v22
    %v24 = vpop.xlane.xlu0 %23
    %v25 = vmul.f32 %v24, 0.00390625
    %vm26 = vcmask 7168
    %27 = vst.msk [vmem:[%s1] sm:$0xff] %vm26, %v25
    // Predicated region
    $region10: #{tpu_custom_call.1} parent=1 // pred_check
      _
    $region11: #{tpu_custom_call.1} parent=1 // pred_check_branch
      %29 = sbr.rel (0) target = $region13
    $region12: #{tpu_custom_call.1} parent=1 // pred_region
      _
    $region13: #{tpu_custom_call.1} parent=1 // pred_fallthru
      _
    // Predicated region
    $region14: #{tpu_custom_call.1} parent=1 // pred_check
      _
    $region15: #{tpu_custom_call.1} parent=1 // pred_check_branch
      %31 = sbr.rel (0) target = $region17
    $region16: #{tpu_custom_call.1} parent=1 // pred_region
      _
    $region17: #{tpu_custom_call.1} parent=1 // pred_fallthru
      _
    %32 = vsyncpa [#allocation3], 1

</llo_original>
